<compile_context>
chip_gen: v5e
topology: v5e:2x2
jax: 0.10.0
libtpu: 0.0.40
codegen_flags: <defaults>
</compile_context>

<pallas_src>
import functools

import jax
import jax.numpy as jnp
import numpy as np
from jax.experimental import pallas as pl
from jax.experimental.pallas import tpu as pltpu

_STRIDE = 5  # per-hole SMEM record: [y1, y2, x1, x2, first_row_block]


def _round_up(v: int, m: int) -> int:
    return -(-v // m) * m


def _pick_tile_h(h: int, length: int) -> int:
    """Row-block height: hole-sized, sublane aligned (multiple of 8), capped at H."""
    th = _round_up(max(int(length), 1), 8)
    return h if th >= h else th


def _cutout_kernel(coords_ref, x_ref, o_ref, *, n_holes: int, tile_h: int,
                   h_blocks: int, width: int):
    """coords_ref: SMEM int32 (N*n_holes*5,) flat records [y1,y2,x1,x2,hb0].
    x_ref / o_ref: VMEM (C, tile_h, width) blocks of the (aliased) image."""
    b = pl.program_id(0)
    n = pl.program_id(1)
    j = pl.program_id(2)

    # Row origin of this block — identical arithmetic to the index_map (add+min
    # on the scalar unit only; the divide was pre-computed on device).
    hb0 = coords_ref[(b * n_holes + n) * _STRIDE + 4]
    row0 = jnp.minimum(hb0 + j, h_blocks - 1) * tile_h

    # Sublane/lane-dense 2-D predicate (no integer division, no (1, tile) vregs).
    rows = row0 + jax.lax.broadcasted_iota(jnp.int32, (tile_h, width), 0)
    cols = jax.lax.broadcasted_iota(jnp.int32, (tile_h, width), 1)

    # Apply ALL holes in every visited block: revisits write byte-identical data,
    # so grid order / aliasing cannot corrupt the output.
    hole = jnp.zeros((tile_h, width), jnp.bool_)
    for m in range(n_holes):  # n_holes is a static hyper-parameter
        base = (b * n_holes + m) * _STRIDE
        y1 = coords_ref[base + 0]
        y2 = coords_ref[base + 1]
        x1 = coords_ref[base + 2]
        x2 = coords_ref[base + 3]
        hole = hole | ((rows >= y1) & (rows < y2) & (cols >= x1) & (cols < x2))

    zero = jnp.zeros((), o_ref.dtype)
    o_ref[...] = jnp.where(hole[None, :, :], zero, x_ref[...])


def cutout_pallas(x: jax.Array, coords: jax.Array, *, length: int) -> jax.Array:
    """x: (N, C, H, W). coords: int32 (N, n_holes, 4) rows of [y1, y2, x1, x2]."""
    N, C, H, W = x.shape
    n_holes = coords.shape[1]

    TH = _pick_tile_h(H, length)
    HB = -(-H // TH)                                     # number of row blocks
    J = min(-(-max(int(length), 1) // TH) + 1, HB)       # row blocks a hole can straddle

    # Pre-compute (clipped) first row-block of each hole so neither the
    # index_map nor the kernel needs a scalar divide.
    hb0 = jnp.clip(coords[..., 0] // TH, 0, HB - 1).astype(jnp.int32)
    recs = jnp.concatenate([coords.astype(jnp.int32), hb0[..., None]], axis=-1)
    recs = recs.reshape(-1)                              # flat 1-D SMEM (no 2-D padding)

    def block_index(b, n, j, coords_ref):
        first = coords_ref[(b * n_holes + n) * _STRIDE + 4]
        return (b, 0, jnp.minimum(first + j, HB - 1), 0)

    kernel = functools.partial(_cutout_kernel, n_holes=n_holes, tile_h=TH,
                               h_blocks=HB, width=W)
    spec = pl.BlockSpec((None, C, TH, W), block_index)   # batch dim squeezed

    return pl.pallas_call(
        kernel,
        out_shape=jax.ShapeDtypeStruct(x.shape, x.dtype),
        grid_spec=pltpu.PrefetchScalarGridSpec(
            num_scalar_prefetch=1,                       # hole records -> SMEM
            grid=(N, n_holes, J),
            in_specs=[spec],
            out_specs=spec,
        ),
        # x aliases the output: unvisited blocks retain the input bytes, so only
        # hole-touching row-blocks ever move HBM<->VMEM.  Operand index 1 counts
        # the scalar-prefetch operand (coords) at index 0.
        input_output_aliases={1: 0},
        compiler_params=pltpu.CompilerParams(
            dimension_semantics=("parallel", "arbitrary", "arbitrary"),
        ),
    )(recs, x)


def make_cutout_coords(key, n_images, h, w, *, n_holes, length, p):
    """Device-side stand-in for the module's host np.random draws.

    Reference convention: h = size(-1), w = size(-2); for the square images the
    PyTorch code supports, y bounds the H axis and x bounds the W axis.
    The p-gate is folded in: skipped images get all-zero (empty) boxes.
    """
    k_apply, k_y, k_x = jax.random.split(key, 3)
    apply = jax.random.uniform(k_apply, (n_images, 1, 1)) <= p   # ref: skip if rand > p
    y = jax.random.randint(k_y, (n_images, n_holes, 1), 0, h)
    xc = jax.random.randint(k_x, (n_images, n_holes, 1), 0, w)
    half = length // 2
    y1 = jnp.clip(y - half, 0, h)
    y2 = jnp.clip(y + half, 0, h)
    x1 = jnp.clip(xc - half, 0, w)
    x2 = jnp.clip(xc + half, 0, w)
    coords = jnp.concatenate([y1, y2, x1, x2], axis=-1).astype(jnp.int32)
    return jnp.where(apply, coords, 0)


@functools.partial(jax.jit, static_argnames=("n_holes", "length", "p"))
def cutout_forward(x: jax.Array, key: jax.Array, *, n_holes: int = 1,
                   length: int = 8, p: float = 1.0) -> jax.Array:
    """Mirrors Cutout.forward on (C, H, W) or a batch (N, C, H, W); fully traceable."""
    squeeze = x.ndim == 3
    if squeeze:
        x = x[None]
    coords = make_cutout_coords(key, x.shape[0], x.shape[-1], x.shape[-2],
                                n_holes=n_holes, length=length, p=p)
    out = cutout_pallas(x, coords, length=length)
    return out[0] if squeeze else out


def _reference(x_np: np.ndarray, coords_np: np.ndarray) -> np.ndarray:
    """Host reference consuming the exact same hole coordinates."""
    out = np.array(x_np, copy=True)
    for b in range(x_np.shape[0]):
        for y1, y2, x1, x2 in coords_np[b]:
            out[b, :, y1:y2, x1:x2] = 0
    return out


if __name__ == "__main__":
    root = jax.random.PRNGKey(0)
    k_img, k_fwd, k_img2, k_fwd2, k_fwd3 = jax.random.split(root, 5)

    # Case 1: module defaults on a small square batch.
    N, C, H, W = 2, 4, 16, 16
    n_holes, length, p = 1, 8, 1.0
    x = jax.random.normal(k_img, (N, C, H, W), dtype=jnp.float32)
    out = jax.block_until_ready(cutout_forward(x, k_fwd, n_holes=n_holes, length=length, p=p))
    assert out.shape == x.shape and out.dtype == x.dtype
    coords = make_cutout_coords(k_fwd, N, H, W, n_holes=n_holes, length=length, p=p)
    np.testing.assert_array_equal(np.asarray(out),
                                  _reference(np.asarray(x), np.asarray(coords)))
    zero_pix = np.asarray(jnp.sum(jnp.abs(out), axis=1) == 0.0)     # (N, H, W)
    assert int(zero_pix.sum(axis=(1, 2)).min()) >= (length // 2) ** 2, "expected cut-out patches"
    assert bool(jnp.all((out == x) | (out == 0.0)))

    # Case 2: larger image, two holes — exercises multi-hole revisits and
    # untouched row-blocks retained purely through the input/output alias.
    x2 = jax.random.normal(k_img2, (2, 3, 32, 32), dtype=jnp.float32)
    out2 = jax.block_until_ready(cutout_forward(x2, k_fwd2, n_holes=2, length=8, p=1.0))
    coords2 = make_cutout_coords(k_fwd2, 2, 32, 32, n_holes=2, length=8, p=1.0)
    np.testing.assert_array_equal(np.asarray(out2),
                                  _reference(np.asarray(x2), np.asarray(coords2)))

    # Case 3: probability gate (p=0.0 -> holes collapse to empty boxes -> identity).
    out3 = jax.block_until_ready(cutout_forward(x2, k_fwd3, n_holes=1, length=8, p=0.0))
    coords3 = make_cutout_coords(k_fwd3, 2, 32, 32, n_holes=1, length=8, p=0.0)
    np.testing.assert_array_equal(np.asarray(out3),
                                  _reference(np.asarray(x2), np.asarray(coords3)))

    print("KERNEL_OK")
</pallas_src>

<mosaic_0001>
module attributes {stable_mosaic.version = 11 : i64} {
  func.func @_cutout_kernel(%arg0: i32, %arg1: i32, %arg2: i32, %arg3: memref<10xi32, #tpu.memory_space<smem>>, %arg4: memref<1x4x8x16xf32, #tpu.memory_space<vmem>>, %arg5: memref<1x4x8x16xf32, #tpu.memory_space<vmem>>) attributes {dimension_semantics = [#tpu.dimension_semantics<parallel>, #tpu.dimension_semantics<arbitrary>, #tpu.dimension_semantics<arbitrary>], iteration_bounds = array<i64: 2, 1, 2>, scalar_prefetch = 1 : i64, scratch_operands = 0 : i64, tpu.core_type = #tpu.core_type<tc>, window_params = [{transform_indices = @transform_0, window_bounds = array<i64: 1, 4, 8, 16>}, {transform_indices = @transform_1, window_bounds = array<i64: 1, 4, 8, 16>}]} {
    %c1_i32 = arith.constant 1 : i32
    %0 = arith.muli %arg0, %c1_i32 : i32
    %1 = arith.addi %0, %arg1 : i32
    %c5_i32 = arith.constant 5 : i32
    %2 = arith.muli %1, %c5_i32 : i32
    %c4_i32 = arith.constant 4 : i32
    %3 = arith.addi %2, %c4_i32 : i32
    %4 = arith.index_cast %3 : i32 to index
    %5 = memref.load %arg3[%4] : memref<10xi32, #tpu.memory_space<smem>>
    %6 = arith.addi %5, %arg2 : i32
    %c1_i32_0 = arith.constant 1 : i32
    %7 = arith.minsi %6, %c1_i32_0 : i32
    %c8_i32 = arith.constant 8 : i32
    %8 = arith.muli %7, %c8_i32 : i32
    %9 = tpu.iota {dimensions = array<i32: 0>} : vector<8x16xi32>
    %10 = vector.broadcast %8 : i32 to vector<8x16xi32>
    %11 = arith.addi %10, %9 : vector<8x16xi32>
    %12 = tpu.iota {dimensions = array<i32: 1>} : vector<8x16xi32>
    %false = arith.constant false
    %13 = vector.broadcast %false : i1 to vector<8x16xi1>
    %c1_i32_1 = arith.constant 1 : i32
    %14 = arith.muli %arg0, %c1_i32_1 : i32
    %c0_i32 = arith.constant 0 : i32
    %15 = arith.addi %14, %c0_i32 : i32
    %c5_i32_2 = arith.constant 5 : i32
    %16 = arith.muli %15, %c5_i32_2 : i32
    %c0_i32_3 = arith.constant 0 : i32
    %17 = arith.addi %16, %c0_i32_3 : i32
    %18 = arith.index_cast %17 : i32 to index
    %19 = memref.load %arg3[%18] : memref<10xi32, #tpu.memory_space<smem>>
    %c1_i32_4 = arith.constant 1 : i32
    %20 = arith.addi %16, %c1_i32_4 : i32
    %21 = arith.index_cast %20 : i32 to index
    %22 = memref.load %arg3[%21] : memref<10xi32, #tpu.memory_space<smem>>
    %c2_i32 = arith.constant 2 : i32
    %23 = arith.addi %16, %c2_i32 : i32
    %24 = arith.index_cast %23 : i32 to index
    %25 = memref.load %arg3[%24] : memref<10xi32, #tpu.memory_space<smem>>
    %c3_i32 = arith.constant 3 : i32
    %26 = arith.addi %16, %c3_i32 : i32
    %27 = arith.index_cast %26 : i32 to index
    %28 = memref.load %arg3[%27] : memref<10xi32, #tpu.memory_space<smem>>
    %29 = vector.broadcast %19 : i32 to vector<8x16xi32>
    %30 = arith.cmpi sge, %11, %29 : vector<8x16xi32>
    %31 = vector.broadcast %22 : i32 to vector<8x16xi32>
    %32 = arith.cmpi slt, %11, %31 : vector<8x16xi32>
    %33 = arith.andi %30, %32 : vector<8x16xi1>
    %34 = vector.broadcast %25 : i32 to vector<8x16xi32>
    %35 = arith.cmpi sge, %12, %34 : vector<8x16xi32>
    %36 = arith.andi %33, %35 : vector<8x16xi1>
    %37 = vector.broadcast %28 : i32 to vector<8x16xi32>
    %38 = arith.cmpi slt, %12, %37 : vector<8x16xi32>
    %39 = arith.andi %36, %38 : vector<8x16xi1>
    %40 = arith.ori %13, %39 : vector<8x16xi1>
    %41 = vector.shape_cast %40 : vector<8x16xi1> to vector<1x8x16xi1>
    %c0 = arith.constant 0 : index
    %c0_5 = arith.constant 0 : index
    %c0_6 = arith.constant 0 : index
    %c0_7 = arith.constant 0 : index
    %42 = vector.load %arg4[%c0, %c0_5, %c0_6, %c0_7] : memref<1x4x8x16xf32, #tpu.memory_space<vmem>>, vector<1x4x8x16xf32>
    %43 = vector.shape_cast %42 : vector<1x4x8x16xf32> to vector<4x8x16xf32>
    %cst = arith.constant 0.000000e+00 : f32
    %44 = vector.shape_cast %41 : vector<1x8x16xi1> to vector<1x8x16xi1>
    %45 = vector.broadcast %44 : vector<1x8x16xi1> to vector<4x8x16xi1>
    %46 = vector.broadcast %cst : f32 to vector<4x8x16xf32>
    %47 = arith.select %45, %46, %43 : vector<4x8x16xi1>, vector<4x8x16xf32>
    %c0_8 = arith.constant 0 : index
    %c0_9 = arith.constant 0 : index
    %c0_10 = arith.constant 0 : index
    %c0_11 = arith.constant 0 : index
    %48 = vector.load %arg5[%c0_8, %c0_9, %c0_10, %c0_11] : memref<1x4x8x16xf32, #tpu.memory_space<vmem>>, vector<1x4x8x16xf32>
    %49 = vector.shape_cast %48 : vector<1x4x8x16xf32> to vector<4x8x16xf32>
    %50 = vector.shape_cast %47 : vector<4x8x16xf32> to vector<1x4x8x16xf32>
    tpu.vector_store %arg5[%c0_8, %c0_9, %c0_10, %c0_11], %50 {strides = array<i32>} : memref<1x4x8x16xf32, #tpu.memory_space<vmem>>, vector<1x4x8x16xf32>,
    return
  }
  func.func @transform_0(%arg0: i32, %arg1: i32, %arg2: i32, %arg3: memref<10xi32, #tpu.memory_space<smem>>) -> (i32, i32, i32, i32) {
    %c1_i32 = arith.constant 1 : i32
    %0 = arith.muli %arg0, %c1_i32 : i32
    %1 = arith.addi %0, %arg1 : i32
    %c5_i32 = arith.constant 5 : i32
    %2 = arith.muli %1, %c5_i32 : i32
    %c4_i32 = arith.constant 4 : i32
    %3 = arith.addi %2, %c4_i32 : i32
    %4 = arith.index_cast %3 : i32 to index
    %5 = memref.load %arg3[%4] : memref<10xi32, #tpu.memory_space<smem>>
    %6 = arith.addi %5, %arg2 : i32
    %c1_i32_0 = arith.constant 1 : i32
    %7 = arith.minsi %6, %c1_i32_0 : i32
    %c0_i32 = arith.constant 0 : i32
    %c0_i32_1 = arith.constant 0 : i32
    %c0_i32_2 = arith.constant 0 : i32
    return %arg0, %c0_i32, %7, %c0_i32_1 : i32, i32, i32, i32
  }
  func.func @transform_1(%arg0: i32, %arg1: i32, %arg2: i32, %arg3: memref<10xi32, #tpu.memory_space<smem>>) -> (i32, i32, i32, i32) {
    %c1_i32 = arith.constant 1 : i32
    %0 = arith.muli %arg0, %c1_i32 : i32
    %1 = arith.addi %0, %arg1 : i32
    %c5_i32 = arith.constant 5 : i32
    %2 = arith.muli %1, %c5_i32 : i32
    %c4_i32 = arith.constant 4 : i32
    %3 = arith.addi %2, %c4_i32 : i32
    %4 = arith.index_cast %3 : i32 to index
    %5 = memref.load %arg3[%4] : memref<10xi32, #tpu.memory_space<smem>>
    %6 = arith.addi %5, %arg2 : i32
    %c1_i32_0 = arith.constant 1 : i32
    %7 = arith.minsi %6, %c1_i32_0 : i32
    %c0_i32 = arith.constant 0 : i32
    %c0_i32_1 = arith.constant 0 : i32
    %c0_i32_2 = arith.constant 0 : i32
    return %arg0, %c0_i32, %7, %c0_i32_1 : i32, i32, i32, i32
  }
}

</mosaic_0001>

<llo_original>
// kernel: cutout_forward.1
$region0: #{cutout_forward.1}
  #allocation0 [shape = 'u32[]', space=smem, size = 0x4, offset = 0x4, fixed_abs, tag = 'smem constant byte address 0x4 - core index']
  #allocation1 [shape = 'u32[72,128]{1,0:T(1,128)}', space=vmem, size = 0x9000, scoped, tag = 'internal scratch']
  #allocation2 [shape = 's32[1]{0}', space=sflag, size = 0x4, scoped, tag = 'scoped memory for cutout_forward.1']
  #allocation3 [shape = 'u8[512]{0}', space=smem, size = 0x200, scoped, tag = 'prefetched SMEM operand 0']
  %s0 = inlined_call_operand.vmem [shape: s32[10], index: 0, kind: input, shape index: {}]
  %s1 = inlined_call_operand.hbm [shape: f32[2,4,16,16], index: 1, kind: input, shape index: {}, may-alias: {1,2}]
  %s2 = inlined_call_operand.hbm [shape: f32[2,4,16,16], index: 2, kind: output, shape index: {}, may-alias: {1,2}]
  %s3 = sld [smem:[#allocation0]]
  $region41: #{cutout_forward.1} parent=0
    _
  %s5 = ssub.s32 1, %s3
  %s6 = scalar_select 0, %s5, %s3
  %s8 = sshll.u32 %s0, 4
  %s9 = int_to_ptr.vmem [resolvable:$true] %s8
  %11 = dma.vmem_to_smem %s9, 16, [#allocation3], [#allocation2]
  %13 = dma.done [#allocation2], 16
  %14 = sfence
  $region1: #{cutout_forward.1} parent=0
    #allocation4 [shape = 'u8[32768]{0}', space=vmem, size = 0x8000, scoped, tag = 'input window, operand 1']
    #allocation5 [shape = 's32[2]{0}', space=sflag, size = 0x8, scoped, tag = 'scoped memory for cutout_forward.1']
    #allocation6 [shape = 's32[2]{0}', space=sflag, size = 0x8, scoped, tag = 'scoped memory for cutout_forward.1']
    #allocation7 [shape = 'u8[32768]{0}', space=vmem, size = 0x8000, scoped, tag = 'output window, operand 0']
    %15 = vsyncpa [#allocation5], 0
    %s16 = scalar_lea.sflag [#allocation5], 1
    %17 = vsyncpa %s16, 0
    %18 = vsyncpa [#allocation6], 0
    %s19 = scalar_lea.sflag [#allocation6], 1
    %20 = vsyncpa %s19, 0
    loop: start=0, step=1, limit=6
    $region2: #{cutout_forward.1} parent=1 // loop_pre_header
      _
    $region3: #{cutout_forward.1} parent=1 // loop_header
      %s22 = sphi 0, %s26
      %p23 = scmp.ge.s32.totalorder %s22, 6
      %s29 = sphi 0, %s48
      %s30 = sphi 0, %s44
      %s31 = sphi 0, %s40
      %s32 = sphi 0, %s29
      %s33 = sphi 0, %s30
      %s34 = sphi 0, %s31
      %s35 = sphi 0, %s32
      %s36 = sphi 0, %s33
      %s37 = sphi 0, %s34
      %s67 = sphi 0, %s69
      %s70 = sphi 0, %s67
      %s71 = sphi 0, %s70
      %s87 = sphi 0, %s71
      %s109 = sphi 0, %s111
      %s112 = sphi 0, %s109
      %s113 = sphi 0, %s112
      %s129 = sphi 0, %s113
    $region4: #{cutout_forward.1} parent=1 // loop_header_branch
      %25 = sbr.rel (%p23) target = $region8
    $region5: #{cutout_forward.1} parent=1 // loop_body
      %s27 = ssub.s32 %s22, 1
      %s28 = ssub.s32 %s22, 2
      %s38 = sadd.s32 1, %s31
      %p39 = scmp.ge.s32.totalorder %s38, 2
      %s40 = scalar_select %p39, 0, %s38
      %s41 = sadd.s32 1, %s30
      %s42 = scalar_select %p39, %s41, %s30
      %p43 = scmp.ge.s32.totalorder %s42, 1
      %s44 = scalar_select %p43, 0, %s42
      %s45 = sadd.s32 1, %s29
      %s46 = scalar_select %p43, %s45, %s29
      %p47 = scmp.ge.s32.totalorder %s46, 2
      %s48 = scalar_select %p47, 0, %s46
      %s49 = sadd.s32 %s29, %s30
      %s50 = smul.u32 %s49, 5
      %s51 = sadd.s32 %s50, 4
      %s52 = sld [smem:[#allocation3 + %s51]]
      %s53 = sadd.s32 %s52, %s31
      %p54 = scmp.lt.s32.totalorder %s53, 1
      %s55 = scalar_select %p54, %s53, 1
      %s56 = sadd.s32 %s48, %s44
      %s57 = smul.u32 %s56, 5
      %s58 = sadd.s32 %s57, 4
      %s59 = sld [smem:[#allocation3 + %s58]]
      %s60 = sadd.s32 %s59, %s40
      %p61 = scmp.lt.s32.totalorder %s60, 1
      %s62 = scalar_select %p61, %s60, 1
      %s63 = ssub.s32 %s29, %s48
      %s64 = ssub.s32 %s55, %s62
      %s65 = sor.u32 %s63, %s64
      %p66 = scmp.eq.s32.totalorder %s65, 0
      %s68 = sadd.s32 %s67, 1
      %s69 = scalar_select %p66, %s67, %s68
      %p72 = pneg %p66
      %p73 = scmp.eq.s32.totalorder %s22, 3
      %p74 = por %p72, %p73
      %p75 = scmp.ne.s32.totalorder %s67, %s70
      %p76 = scmp.eq.s32.totalorder %s22, 0
      %p77 = por %p75, %p76
      %p78 = scmp.ne.s32.totalorder %s67, %s70
      %p79 = scmp.eq.s32.totalorder %s27, 3
      %p80 = por %p78, %p79
      %p81 = scmp.ne.s32.totalorder %s70, %s71
      %p82 = scmp.eq.s32.totalorder %s27, 0
      %p83 = por %p81, %p82
      %p84 = scmp.ne.s32.totalorder %s70, %s71
      %p85 = scmp.eq.s32.totalorder %s28, 3
      %p86 = por %p84, %p85
      %p88 = scmp.ne.s32.totalorder %s71, %s87
      %p89 = scmp.eq.s32.totalorder %s28, 0
      %p90 = por %p88, %p89
      %s91 = sadd.s32 %s29, %s30
      %s92 = smul.u32 %s91, 5
      %s93 = sadd.s32 %s92, 4
      %s94 = sld [smem:[#allocation3 + %s93]]
      %s95 = sadd.s32 %s94, %s31
      %p96 = scmp.lt.s32.totalorder %s95, 1
      %s97 = scalar_select %p96, %s95, 1
      %s98 = sadd.s32 %s48, %s44
      %s99 = smul.u32 %s98, 5
      %s100 = sadd.s32 %s99, 4
      %s101 = sld [smem:[#allocation3 + %s100]]
      %s102 = sadd.s32 %s101, %s40
      %p103 = scmp.lt.s32.totalorder %s102, 1
      %s104 = scalar_select %p103, %s102, 1
      %s105 = ssub.s32 %s29, %s48
      %s106 = ssub.s32 %s97, %s104
      %s107 = sor.u32 %s105, %s106
      %p108 = scmp.eq.s32.totalorder %s107, 0
      %s110 = sadd.s32 %s109, 1
      %s111 = scalar_select %p108, %s109, %s110
      %p114 = pneg %p108
      %p115 = scmp.eq.s32.totalorder %s22, 3
      %p116 = por %p114, %p115
      %p117 = scmp.ne.s32.totalorder %s109, %s112
      %p118 = scmp.eq.s32.totalorder %s22, 0
      %p119 = por %p117, %p118
      %p120 = scmp.ne.s32.totalorder %s109, %s112
      %p121 = scmp.eq.s32.totalorder %s27, 3
      %p122 = por %p120, %p121
      %p123 = scmp.ne.s32.totalorder %s112, %s113
      %p124 = scmp.eq.s32.totalorder %s27, 0
      %p125 = por %p123, %p124
      %p126 = scmp.ne.s32.totalorder %s112, %s113
      %p127 = scmp.eq.s32.totalorder %s28, 3
      %p128 = por %p126, %p127
      %p130 = scmp.ne.s32.totalorder %s113, %s129
      %p131 = scmp.eq.s32.totalorder %s28, 0
      %p132 = por %p130, %p131
      %p133 = scmp.le.s32.totalorder 1, %s22
      %p134 = scmp.lt.s32.totalorder %s22, 5
      %p135 = pnand %p133, %p134
      %p136 = pneg %p135
      // Predicated region
      $region9: #{cutout_forward.1} parent=5 // pred_check
        _
      $region10: #{cutout_forward.1} parent=5 // pred_check_branch
        %138 = sbr.rel (%p135) target = $region12
      $region11: #{cutout_forward.1} parent=5 // pred_region
        %s139 = ssub.s32 %s22, 1
      $region12: #{cutout_forward.1} parent=5 // pred_fallthru
        _
      %p140 = scmp.lt.s32.totalorder %s22, 4
      // Predicated region
      $region13: #{cutout_forward.1} parent=5 // pred_check
        %p141 = pneg %p140
      $region14: #{cutout_forward.1} parent=5 // pred_check_branch
        %143 = sbr.rel (%p141) target = $region16
      $region15: #{cutout_forward.1} parent=5 // pred_region
        // Predicated region
        $region17: #{cutout_forward.1} parent=15 // pred_check
          %p144 = pneg %p77
        $region18: #{cutout_forward.1} parent=15 // pred_check_branch
          %146 = sbr.rel (%p144) target = $region20
        $region19: #{cutout_forward.1} parent=15 // pred_region
          %s147 = sand.u32 %s67, 1
          %s148 = scalar_lea.sflag [#allocation5], %s147
          %s149 = sand.u32 %s67, 1
          %s150 = smul.addr %s149, 32
          %s151 = scalar_lea.vmem [#allocation4], %s150
          %s152 = sadd.s32 %s29, %s30
          %s153 = smul.u32 %s152, 5
          %s154 = sadd.s32 %s153, 4
          %s155 = sld [smem:[#allocation3 + %s154]]
          %s156 = sadd.s32 %s155, %s31
          %p157 = scmp.lt.s32.totalorder %s156, 1
          %s158 = scalar_select %p157, %s156, 1
          %160 = vsyncadd %s148, 0
          %s161 = smul.addr %s29, 8
          %s162 = sadd.s32 %s158, %s161
          %s163 = smul.addr %s162, 8
          %s164 = scalar_lea.hbm %s1, %s163
          %s165 = sshll.u32 %s164, 4
          %s166 = int_to_ptr.hbm [resolvable:$true] %s165
          %s167 = sshll.u32 %s151, 4
          %s168 = int_to_ptr.vmem [resolvable:$true] %s167
          %173 = dma.hbm_to_vmem [thread:$0]  %s166, 512, %s168, %s148, 256, 128, 8
        $region20: #{cutout_forward.1} parent=15 // pred_fallthru
          _
      $region16: #{cutout_forward.1} parent=5 // pred_fallthru
        _
      %p174 = scmp.le.s32.totalorder 1, %s22
      %p175 = scmp.lt.s32.totalorder %s22, 5
      %p176 = pnand %p174, %p175
      %p177 = pneg %p176
      // Predicated region
      $region21: #{cutout_forward.1} parent=5 // pred_check
        _
      $region22: #{cutout_forward.1} parent=5 // pred_check_branch
        %179 = sbr.rel (%p176) target = $region24
      $region23: #{cutout_forward.1} parent=5 // pred_region
        %s180 = ssub.s32 %s22, 1
        %s181 = sand.u32 %s70, 1
        %s182 = scalar_lea.sflag [#allocation5], %s181
        %s183 = sand.u32 %s70, 1
        %s184 = smul.addr %s183, 32
        %s185 = scalar_lea.vmem [#allocation4], %s184
        // Predicated region
        $region25: #{cutout_forward.1} parent=23 // pred_check
          %p186 = pneg %p83
        $region26: #{cutout_forward.1} parent=23 // pred_check_branch
          %188 = sbr.rel (%p186) target = $region28
        $region27: #{cutout_forward.1} parent=23 // pred_region
          %190 = dma.done %s182, 512
        $region28: #{cutout_forward.1} parent=23 // pred_fallthru
          _
        %s191 = sand.u32 %s70, 1
        %s192 = scalar_lea.sflag [#allocation5], %s191
        %s193 = sand.u32 %s70, 1
        %s194 = smul.addr %s193, 32
        %s195 = scalar_lea.vmem [#allocation4], %s194
        %p196 = pneg %p83
        %p197 = pneg %p80
        %p198 = pneg %p125
        %p199 = pneg %p122
        %s200 = sand.u32 %s112, 1
        %s201 = scalar_lea.sflag [#allocation6], %s200
        %s202 = sand.u32 %s112, 1
        %s203 = smul.addr %s202, 32
        %s204 = scalar_lea.vmem [#allocation7], %s203
        %s205 = sadd.s32 %s32, %s33
        %s206 = smul.u32 %s205, 5
        %s207 = sadd.s32 %s206, 4
        %s208 = sld [smem:[#allocation3 + %s207]]
        %s209 = sadd.s32 %s208, %s34
        %p210 = scmp.lt.s32.totalorder %s209, 1
        %s211 = scalar_select %p210, %s209, 1
        %s212 = sadd.s32 %s32, %s33
        %s213 = smul.u32 %s212, 5
        %s214 = sadd.s32 %s213, 4
        %s215 = sld [smem:[#allocation3 + %s214]]
        %s216 = sadd.s32 %s215, %s34
        %p217 = scmp.lt.s32.totalorder %s216, 1
        %s218 = scalar_select %p217, %s216, 1
        %s219 = sadd.s32 %s32, %s33
        %s220 = smul.u32 %s219, 5
        %s221 = sadd.s32 %s220, 4
        %s222 = sld [smem:[#allocation3 + %s221]]
        %s223 = sadd.s32 %s222, %s34
        %p224 = scmp.lt.s32.totalorder %s223, 1
        %s225 = scalar_select %p224, %s223, 1
        %s226 = smul.u32 %s225, 8
        %v227 = vlaneseq
        %v228 = vshrl.u32 %v227, 7
        %v229 = vstv %s226
        %v230 = vadd.s32 %v229, %v228
        %v231 = vlaneseq
        %v232 = vand.u32 %v231, 127
        %s233 = smul.u32 %s32, 5
        %s234 = sld [smem:[#allocation3 + %s233]]
        %s235 = sadd.s32 %s233, 1
        %s236 = sld [smem:[#allocation3 + %s235]]
        %s237 = sadd.s32 %s233, 2
        %s238 = sld [smem:[#allocation3 + %s237]]
        %s239 = sadd.s32 %s233, 3
        %s240 = sld [smem:[#allocation3 + %s239]]
        %v241 = vstv %s234
        %vm242 = vcmp.ge.s32.totalorder %v230, %v241
        %v243 = vstv %s236
        %vm244 = vcmp.lt.s32.totalorder %v230, %v243
        %vm245 = vmand %vm242, %vm244
        %v246 = vstv %s238
        %vm247 = vcmp.ge.s32.totalorder %v232, %v246
        %vm248 = vmand %vm245, %vm247
        %v249 = vstv %s240
        %vm250 = vcmp.lt.s32.totalorder %v232, %v249
        %vm251 = vmand %vm248, %vm250
        %v252 = vld [vmem:[%s185] sm:$0xff]
        %v253 = vld [vmem:[%s185 + $0x8] sm:$0xff]
        %v254 = vld [vmem:[%s185 + $0x10] sm:$0xff]
        %v255 = vld [vmem:[%s185 + $0x18] sm:$0xff]
        %v256 = vsel %vm251, 1, 0
        %vm257 = vcmp.eq.s32.totalorder %v256, 1
        %v258 = vsel %vm257, 0.0, %v252
        %v259 = vsel %vm257, 0.0, %v253
        %v260 = vsel %vm257, 0.0, %v254
        %v261 = vsel %vm257, 0.0, %v255
        %vm262 = vcmask 130048
        %263 = vst.msk [vmem:[%s204] sm:$0xff] %vm262, %v258
        %264 = vst.msk [vmem:[%s204 + $0x8] sm:$0xff] %vm262, %v259
        %265 = vst.msk [vmem:[%s204 + $0x10] sm:$0xff] %vm262, %v260
        %266 = vst.msk [vmem:[%s204 + $0x18] sm:$0xff] %vm262, %v261
        %s267 = sand.u32 %s112, 1
        %s268 = scalar_lea.sflag [#allocation6], %s267
        %s269 = sand.u32 %s112, 1
        %s270 = smul.addr %s269, 32
        %s271 = scalar_lea.vmem [#allocation7], %s270
        // Predicated region
        $region29: #{cutout_forward.1} parent=23 // pred_check
          %p272 = pneg %p122
        $region30: #{cutout_forward.1} parent=23 // pred_check_branch
          %274 = sbr.rel (%p272) target = $region32
        $region31: #{cutout_forward.1} parent=23 // pred_region
          %s275 = sadd.s32 %s32, %s33
          %s276 = smul.u32 %s275, 5
          %s277 = sadd.s32 %s276, 4
          %s278 = sld [smem:[#allocation3 + %s277]]
          %s279 = sadd.s32 %s278, %s34
          %p280 = scmp.lt.s32.totalorder %s279, 1
          %s281 = scalar_select %p280, %s279, 1
          %283 = vsyncadd %s268, 0
          %s284 = smul.addr %s32, 8
          %s285 = sadd.s32 %s281, %s284
          %s286 = smul.addr %s285, 8
          %s287 = scalar_lea.hbm %s2, %s286
          %s288 = sshll.u32 %s271, 4
          %s289 = int_to_ptr.vmem [resolvable:$true] %s288
          %s290 = sshll.u32 %s287, 4
          %s291 = int_to_ptr.hbm [resolvable:$true] %s290
          %296 = dma.vmem_to_hbm [thread:$0]  %s289, 512, %s291, %s268, 128, 256, 8
        $region32: #{cutout_forward.1} parent=23 // pred_fallthru
          _
      $region24: #{cutout_forward.1} parent=5 // pred_fallthru
        _
      %p297 = scmp.le.s32.totalorder 2, %s22
      // Predicated region
      $region33: #{cutout_forward.1} parent=5 // pred_check
        %p298 = pneg %p297
      $region34: #{cutout_forward.1} parent=5 // pred_check_branch
        %300 = sbr.rel (%p298) target = $region36
      $region35: #{cutout_forward.1} parent=5 // pred_region
        %s301 = ssub.s32 %s22, 2
        // Predicated region
        $region37: #{cutout_forward.1} parent=35 // pred_check
          %p302 = pneg %p128
        $region38: #{cutout_forward.1} parent=35 // pred_check_branch
          %304 = sbr.rel (%p302) target = $region40
        $region39: #{cutout_forward.1} parent=35 // pred_region
          %s305 = sand.u32 %s113, 1
          %s306 = scalar_lea.sflag [#allocation6], %s305
          %s307 = sand.u32 %s113, 1
          %s308 = smul.addr %s307, 32
          %s309 = scalar_lea.vmem [#allocation7], %s308
          %311 = dma.done %s306, 512
        $region40: #{cutout_forward.1} parent=35 // pred_fallthru
          _
      $region36: #{cutout_forward.1} parent=5 // pred_fallthru
        _
    $region6: #{cutout_forward.1} parent=1 // loop_footer
      %s26 = sadd.s32 1, %s22
    $region7: #{cutout_forward.1} parent=1 // loop_footer_branch
      %21 = sbr.rel target = $region3
    $region8: #{cutout_forward.1} parent=1 // loop_exit
      _
    %312 = vsyncpa [#allocation5], 1
    %s313 = scalar_lea.sflag [#allocation5], 1
    %314 = vsyncpa %s313, 1
    %315 = vsyncpa [#allocation6], 1
    %s316 = scalar_lea.sflag [#allocation6], 1
    %317 = vsyncpa %s316, 1

</llo_original>
